<compile_context>
chip_gen: v6e
topology: v6e:2x2x1
jax: 0.10.0
libtpu: 0.0.40
codegen_flags: <defaults>
</compile_context>

<pallas_src>
import jax
import jax.numpy as jnp
from jax.experimental import pallas as pl
from jax.experimental.pallas import tpu as pltpu


def _round_up(x, m):
    return ((x + m - 1) // m) * m


def _decoder_matmul_kernel(y_ref, a_ref, o_ref):
    # One (tm, K) x (K, N) tile on the MXU, f32 accumulation.
    o_ref[...] = jnp.dot(
        y_ref[...], a_ref[...], preferred_element_type=jnp.float32
    ).astype(o_ref.dtype)


def decoder_forward(y_w, A, code_book_len, cluster_num, *, tm=2048,
                    compute_dtype=None, out_dtype=None):
    """E_hat = reshape(y_w, (-1, code_book_len*cluster_num)) @ A

    tm            : M-tile size (rows per grid step); rounded to a multiple of
                    8 sublanes and capped at ~ceil(M/2) so the parallel M axis
                    has >= 2 steps (v7x dual-TC) whenever M allows.
    compute_dtype : optionally cast inputs (e.g. jnp.bfloat16) to halve HBM
                    read traffic; accumulation stays f32.
    out_dtype     : output dtype (defaults to y_w's dtype).
    """
    K = code_book_len * cluster_num
    y2d = y_w.reshape(-1, K)                      # glue: reshape in plain JAX
    M = y2d.shape[0]
    N = A.shape[1]
    if out_dtype is None:
        out_dtype = y2d.dtype

    # Tile over M: multiple of 8 sublanes, capped at ~M/2 so grid_m >= 2 when
    # M is large enough (both v7x TensorCores get work). No padding of y or of
    # the output: the final partial block is handled by Pallas (OOB reads feed
    # only OOB output rows, whose stores are masked).
    half_m = _round_up(-(-M // 2), 8)
    tm = max(8, _round_up(min(tm, half_m), 8))
    grid_m = pl.cdiv(M, tm)

    # Optional reduced-precision input path (f32 accumulate in the kernel).
    if compute_dtype is not None:
        y2d = y2d.astype(compute_dtype)
        A = A.astype(compute_dtype)

    in_bytes = jnp.dtype(y2d.dtype).itemsize
    out_bytes = jnp.dtype(out_dtype).itemsize
    cost = pl.CostEstimate(
        flops=2 * M * K * N,
        transcendentals=0,
        bytes_accessed=in_bytes * (M * K + K * N) + out_bytes * M * N,
    )

    return pl.pallas_call(
        _decoder_matmul_kernel,
        out_shape=jax.ShapeDtypeStruct((M, N), out_dtype),
        grid_spec=pltpu.PrefetchScalarGridSpec(
            num_scalar_prefetch=0,
            grid=(grid_m,),
            in_specs=[
                pl.BlockSpec((tm, K), lambda i: (i, 0)),   # y: tiled over M
                pl.BlockSpec((K, N), lambda i: (0, 0)),    # A: resident in VMEM
            ],
            out_specs=pl.BlockSpec((tm, N), lambda i: (i, 0)),
        ),
        compiler_params=pltpu.CompilerParams(
            dimension_semantics=("parallel",),   # shard M over v7x's 2 TCs
        ),
        cost_estimate=cost,
    )(y2d, A)


if __name__ == "__main__":
    # Deterministic synthetic config (mirrors args.* in the PyTorch module).
    hidden_dim = 32
    cluster_num = 4
    code_book_len = 8
    batch = 2
    K = code_book_len * cluster_num

    key = jax.random.PRNGKey(0)
    k_y, k_a, k_y2 = jax.random.split(key, 3)

    # Input y_w: (batch, code_book_len, cluster_num) -> flattened to (batch, K)
    y_w = jax.random.normal(
        k_y, (batch, code_book_len, cluster_num), dtype=jnp.float32)
    # Parameter A: deterministic init (stands in for nn.Parameter FloatTensor).
    A = jax.random.normal(k_a, (K, hidden_dim), dtype=jnp.float32) * 0.02

    # Small-M path (grid = 1, partial block, masked output store).
    E_hat = jax.block_until_ready(
        decoder_forward(y_w, A, code_book_len, cluster_num))
    ref = y_w.reshape(-1, K) @ A
    assert E_hat.shape == (batch, hidden_dim)
    assert jnp.allclose(E_hat, ref, atol=1e-5, rtol=1e-5)

    # Multi-tile path: M = 210 not divisible by the tile -> exercises the
    # un-padded cdiv grid, A residency, masked last-block store, parallel axis.
    y_w2 = jax.random.normal(
        k_y2, (70, 3, code_book_len, cluster_num), dtype=jnp.float32)
    E_hat2 = jax.block_until_ready(
        decoder_forward(y_w2, A, code_book_len, cluster_num, tm=128))
    ref2 = y_w2.reshape(-1, K) @ A
    assert E_hat2.shape == (70 * 3, hidden_dim)
    assert jnp.allclose(E_hat2, ref2, atol=1e-5, rtol=1e-5)

    # bf16 input path (production HBM-bound option): validated with the looser
    # tolerance appropriate for bf16 inputs + f32 MXU accumulation.
    E_hat3 = jax.block_until_ready(
        decoder_forward(y_w2, A, code_book_len, cluster_num, tm=128,
                        compute_dtype=jnp.bfloat16))
    assert E_hat3.shape == (70 * 3, hidden_dim)
    assert jnp.allclose(E_hat3, ref2, atol=3e-2, rtol=3e-2)

    print("KERNEL_OK")
</pallas_src>

<mosaic_0001>
module attributes {stable_mosaic.version = 11 : i64} {
  func.func @_decoder_matmul_kernel(%arg0: i32, %arg1: memref<8x32xf32, #tpu.memory_space<vmem>>, %arg2: memref<32x32xf32, #tpu.memory_space<vmem>>, %arg3: memref<8x32xf32, #tpu.memory_space<vmem>>) attributes {dimension_semantics = [#tpu.dimension_semantics<parallel>], iteration_bounds = array<i64: 1>, scalar_prefetch = 0 : i64, scratch_operands = 0 : i64, tpu.core_type = #tpu.core_type<tc>, window_params = [{transform_indices = @transform_0, window_bounds = array<i64: 8, 32>}, {pipeline_mode = #tpu.pipeline_mode<synchronous>, transform_indices = @transform_1, window_bounds = array<i64: 32, 32>}, {transform_indices = @transform_2, window_bounds = array<i64: 8, 32>}]} {
    %c0 = arith.constant 0 : index
    %c0_0 = arith.constant 0 : index
    %0 = vector.load %arg1[%c0, %c0_0] : memref<8x32xf32, #tpu.memory_space<vmem>>, vector<8x32xf32>
    %c0_1 = arith.constant 0 : index
    %c0_2 = arith.constant 0 : index
    %1 = vector.load %arg2[%c0_1, %c0_2] : memref<32x32xf32, #tpu.memory_space<vmem>>, vector<32x32xf32>
    %cst = arith.constant dense<0.000000e+00> : vector<8x32xf32>
    %2 = tpu.matmul %0, %1, %cst {dimension_numbers = #tpu.dot_dimension_numbers<[1], [0], [0], [1], [0, 0, 1, 1], [], []>} : vector<8x32xf32>, vector<32x32xf32>, vector<8x32xf32> -> vector<8x32xf32>
    %c0_3 = arith.constant 0 : index
    %c0_4 = arith.constant 0 : index
    %3 = vector.load %arg3[%c0_3, %c0_4] : memref<8x32xf32, #tpu.memory_space<vmem>>, vector<8x32xf32>
    tpu.vector_store %arg3[%c0_3, %c0_4], %2 {strides = array<i32>} : memref<8x32xf32, #tpu.memory_space<vmem>>, vector<8x32xf32>,
    return
  }
  func.func @transform_0(%arg0: i32) -> (i32, i32) {
    %c0_i32 = arith.constant 0 : i32
    %c0_i32_0 = arith.constant 0 : i32
    return %arg0, %c0_i32 : i32, i32
  }
  func.func @transform_1(%arg0: i32) -> (i32, i32) {
    %c0_i32 = arith.constant 0 : i32
    %c0_i32_0 = arith.constant 0 : i32
    %c0_i32_1 = arith.constant 0 : i32
    return %c0_i32, %c0_i32_0 : i32, i32
  }
  func.func @transform_2(%arg0: i32) -> (i32, i32) {
    %c0_i32 = arith.constant 0 : i32
    %c0_i32_0 = arith.constant 0 : i32
    return %arg0, %c0_i32 : i32, i32
  }
}

</mosaic_0001>

<llo_original>
// kernel: tpu_custom_call.1
$region0: #{tpu_custom_call.1}
  #allocation0 [shape = 'u32[]', space=smem, size = 0x4, offset = 0x4, fixed_abs, tag = 'smem constant byte address 0x4 - core index']
  #allocation1 [shape = 'u32[144,128]{1,0:T(1,128)}', space=vmem, size = 0x12000, scoped, tag = 'internal scratch']
  %s0 = inlined_call_operand.hbm [shape: f32[2,32], index: 0, kind: input, shape index: {}]
  %s1 = inlined_call_operand.hbm [shape: f32[32,32], index: 1, kind: input, shape index: {}]
  %s2 = inlined_call_operand.hbm [shape: f32[2,32], index: 2, kind: output, shape index: {}]
  %s3 = sld [smem:[#allocation0]]
  $region26: #{tpu_custom_call.1} parent=0
    _
  %s5 = ssub.s32 1, %s3
  %s6 = scalar_select 0, %s5, %s3
  $region1: #{tpu_custom_call.1} parent=0
    #allocation2 [shape = 'u8[4096]{0}', space=vmem, size = 0x1000, scoped, tag = 'input window, operand 0, single buffered']
    #allocation3 [shape = 's32[1]{0}', space=sflag, size = 0x4, scoped, tag = 'scoped memory for tpu_custom_call.1']
    #allocation4 [shape = 's32[1]{0}', space=sflag, size = 0x4, scoped, tag = 'scoped memory for tpu_custom_call.1']
    #allocation5 [shape = 'u8[16384]{0}', space=vmem, size = 0x4000, scoped, tag = 'input window, operand 1, single buffered']
    #allocation6 [shape = 's32[1]{0}', space=sflag, size = 0x4, scoped, tag = 'scoped memory for tpu_custom_call.1']
    #allocation7 [shape = 'u8[4096]{0}', space=vmem, size = 0x1000, scoped, tag = 'output window, operand 0, single buffered']
    %7 = vsyncpa [#allocation3], 0
    %8 = vsyncpa [#allocation6], 0
    %9 = vsyncpa [#allocation4], 0
    // Predicated region
    $region2: #{tpu_custom_call.1} parent=1 // pred_check
      _
    $region3: #{tpu_custom_call.1} parent=1 // pred_check_branch
      %11 = sbr.rel (0) target = $region5
    $region4: #{tpu_custom_call.1} parent=1 // pred_region
      %s13 = ssub.s32 128, 32
      %14 = vsyncadd [#allocation3], %s13
      %s15 = sshll.u32 [#allocation2], 4
      %s16 = int_to_ptr.vmem [resolvable:$true] %s15
      %21 = dma.hbm_to_vmem [thread:$0]  %s0, 32, %s16, [#allocation3], 32, 32, 2
    $region5: #{tpu_custom_call.1} parent=1 // pred_fallthru
      _
    // Predicated region
    $region6: #{tpu_custom_call.1} parent=1 // pred_check
      _
    $region7: #{tpu_custom_call.1} parent=1 // pred_check_branch
      %23 = sbr.rel (0) target = $region9
    $region8: #{tpu_custom_call.1} parent=1 // pred_region
      %s25 = ssub.s32 512, 512
      %26 = vsyncadd [#allocation6], %s25
      %s27 = sshll.u32 [#allocation5], 4
      %s28 = int_to_ptr.vmem [resolvable:$true] %s27
      %33 = dma.hbm_to_vmem [thread:$0]  %s1, 512, %s28, [#allocation6], 128, 128, 8
    $region9: #{tpu_custom_call.1} parent=1 // pred_fallthru
      _
    // Predicated region
    $region10: #{tpu_custom_call.1} parent=1 // pred_check
      _
    $region11: #{tpu_custom_call.1} parent=1 // pred_check_branch
      %35 = sbr.rel (0) target = $region13
    $region12: #{tpu_custom_call.1} parent=1 // pred_region
      %36 = dma.done [#allocation3], 128
    $region13: #{tpu_custom_call.1} parent=1 // pred_fallthru
      _
    // Predicated region
    $region14: #{tpu_custom_call.1} parent=1 // pred_check
      _
    $region15: #{tpu_custom_call.1} parent=1 // pred_check_branch
      %38 = sbr.rel (0) target = $region17
    $region16: #{tpu_custom_call.1} parent=1 // pred_region
      %39 = dma.done [#allocation6], 512
    $region17: #{tpu_custom_call.1} parent=1 // pred_fallthru
      _
    %v40 = vld [vmem:[#allocation2] sm:$0xff]
    %v41 = vld [vmem:[#allocation5] sm:$0xff]
    %v42 = vld [vmem:[#allocation5 + $0x8] sm:$0xff]
    %v43 = vld [vmem:[#allocation5 + $0x10] sm:$0xff]
    %v44 = vld [vmem:[#allocation5 + $0x18] sm:$0xff]
    %vm45 = vcmask 261120
    %v47 = vsel %vm45, %v40, 0
    %49 = vmatprep.subr.mxu0 0.0
    %50 = vmatpush1.msra.mxu0 0.0
    %51 = vmatprep.subr.mxu0 0.0
    %52 = vmatpush1.msra.mxu0 0.0
    %53 = vmatprep.subr.mxu0 0.0
    %54 = vmatpush1.msra.mxu0 0.0
    %55 = vmatprep.subr.mxu0 0.0
    %56 = vmatpush1.msra.mxu0 0.0
    %57 = vmatprep.subr.mxu0 0.0
    %58 = vmatpush1.msra.mxu0 0.0
    %59 = vmatprep.subr.mxu0 0.0
    %60 = vmatpush1.msra.mxu0 0.0
    %61 = vmatprep.subr.mxu0 0.0
    %62 = vmatpush1.msra.mxu0 0.0
    %63 = vmatprep.subr.mxu0 0.0
    %64 = vmatpush1.msra.mxu0 0.0
    %65 = vmatprep.subr.mxu0 0.0
    %66 = vmatpush1.msra.mxu0 0.0
    %67 = vmatprep.subr.mxu0 0.0
    %68 = vmatpush1.msra.mxu0 0.0
    %69 = vmatprep.subr.mxu0 0.0
    %70 = vmatpush1.msra.mxu0 0.0
    %71 = vmatprep.subr.mxu0 0.0
    %72 = vmatpush1.msra.mxu0 0.0
    %73 = vmatprep.subr.mxu0 0.0
    %74 = vmatpush1.msra.mxu0 %v44
    %75 = vmatprep.subr.mxu0 0.0
    %76 = vmatpush1.msra.mxu0 %v43
    %77 = vmatprep.subr.mxu0 0.0
    %78 = vmatpush1.msra.mxu0 %v42
    %79 = vmatprep.subr.mxu0 0.0
    %80 = vmatpush1.msra.mxu0 %v41
    %81 = vmatprep.subr.mxu0 0.0
    %82 = vmatpush2.msra.mxu0 0.0
    %83 = vmatprep.subr.mxu0 0.0
    %84 = vmatpush2.msra.mxu0 0.0
    %85 = vmatprep.subr.mxu0 0.0
    %86 = vmatpush2.msra.mxu0 0.0
    %87 = vmatprep.subr.mxu0 0.0
    %88 = vmatpush2.msra.mxu0 0.0
    %89 = vmatprep.subr.mxu0 0.0
    %90 = vmatpush2.msra.mxu0 0.0
    %91 = vmatprep.subr.mxu0 0.0
    %92 = vmatpush2.msra.mxu0 0.0
    %93 = vmatprep.subr.mxu0 0.0
    %94 = vmatpush2.msra.mxu0 0.0
    %95 = vmatprep.subr.mxu0 0.0
    %96 = vmatpush2.msra.mxu0 0.0
    %97 = vmatprep.subr.mxu0 0.0
    %98 = vmatpush2.msra.mxu0 0.0
    %99 = vmatprep.subr.mxu0 0.0
    %100 = vmatpush2.msra.mxu0 0.0
    %101 = vmatprep.subr.mxu0 0.0
    %102 = vmatpush2.msra.mxu0 0.0
    %103 = vmatprep.subr.mxu0 0.0
    %104 = vmatpush2.msra.mxu0 0.0
    %105 = vmatprep.subr.mxu0 0.0
    %106 = vmatpush2.msra.mxu0 0.0
    %107 = vmatprep.subr.mxu0 0.0
    %108 = vmatpush2.msra.mxu0 0.0
    %109 = vmatprep.subr.mxu0 0.0
    %110 = vmatpush2.msra.mxu0 0.0
    %111 = vmatprep.subr.mxu0 0.0
    %112 = vmatpush2.msra.mxu0 0.0
    %113 = vmatprep.mubr.f32.mxu0 0.0
    %114 = vmatmul.mubr.f32.gmra.mxu0 %v47
    %v115 = vpop.f32.mrf.mxu0
    %v116 = vadd.f32 0.0, %v115
    %v117 = vpop.f32.mrf.mxu0
    %118 = vdwg.mxu0
    %119 = vst.msk [vmem:[#allocation7] sm:$0xff] %vm45, %v116
    // Predicated region
    $region18: #{tpu_custom_call.1} parent=1 // pred_check
      _
    $region19: #{tpu_custom_call.1} parent=1 // pred_check_branch
      %121 = sbr.rel (0) target = $region21
    $region20: #{tpu_custom_call.1} parent=1 // pred_region
      %s123 = ssub.s32 128, 32
      %124 = vsyncadd [#allocation4], %s123
      %s125 = sshll.u32 [#allocation7], 4
      %s126 = int_to_ptr.vmem [resolvable:$true] %s125
      %131 = dma.vmem_to_hbm [thread:$0]  %s126, 32, %s2, [#allocation4], 32, 32, 2
    $region21: #{tpu_custom_call.1} parent=1 // pred_fallthru
      _
    // Predicated region
    $region22: #{tpu_custom_call.1} parent=1 // pred_check
      _
    $region23: #{tpu_custom_call.1} parent=1 // pred_check_branch
      %133 = sbr.rel (0) target = $region25
    $region24: #{tpu_custom_call.1} parent=1 // pred_region
      %134 = dma.done [#allocation4], 128
    $region25: #{tpu_custom_call.1} parent=1 // pred_fallthru
      _
    %135 = vsyncpa [#allocation3], 1
    %136 = vsyncpa [#allocation6], 1
    %137 = vsyncpa [#allocation4], 1

</llo_original>
